<compile_context>
chip_gen: v6e
topology: v6e:2x2x1
jax: 0.10.0
libtpu: 0.0.40
codegen_flags: <defaults>
</compile_context>

<pallas_src>
import functools

import jax
import jax.numpy as jnp
from jax.experimental import pallas as pl
from jax.experimental.pallas import tpu as pltpu


def value_head_kernel(x_ref, w1_ref, b1_ref, w2_ref, b2_ref,
                      w3_ref, b3_ref, wf_ref, bf_ref, o_ref, acc_ref,
                      *, inv_n):
    j = pl.program_id(1)

    @pl.when(j == 0)
    def _init():
        acc_ref[...] = jnp.zeros_like(acc_ref)

    # Running sum over the sequence axis (axis=1 of the (TB, TN, C) tile),
    # accumulated in f32 without materializing a separate f32 copy of the tile.
    acc_ref[...] += jnp.sum(x_ref[...], axis=1, dtype=jnp.float32)

    @pl.when(j == pl.num_programs(1) - 1)
    def _finalize():
        xm = acc_ref[...] * inv_n                              # (TB, C) mean, f32

        h = jnp.dot(xm, w1_ref[...], preferred_element_type=jnp.float32) + b1_ref[...]
        h = jnp.maximum(h, 0.0)
        h = jnp.dot(h, w2_ref[...], preferred_element_type=jnp.float32) + b2_ref[...]
        h = jnp.maximum(h, 0.0)
        h = jnp.dot(h, w3_ref[...], preferred_element_type=jnp.float32) + b3_ref[...]
        h = jnp.maximum(h, 0.0)

        # Final (D -> 1) layer: VPU multiply + XLU lane-reduce; avoids a
        # width-1 (lane-sparse) MXU matmul.
        out = jnp.sum(h * wf_ref[...], axis=-1, keepdims=True) + bf_ref[...]
        o_ref[...] = out.astype(o_ref.dtype)                   # (TB, 1)


def _default_tile(n, cap):
    """Largest multiple-of-8 divisor of n that is <= cap; fall back to n."""
    if n % 8 != 0:
        return n
    best = n if n <= cap else 8
    t = 8
    while t <= min(n, cap):
        if n % t == 0:
            best = t
        t += 8
    return best


def value_head(x, params, *, tb=None, tn=None):
    """x: (B, N, C); params: dict of pre-transposed weights/biases."""
    B, N, C = x.shape
    D = params["w1"].shape[1]

    if tb is None:
        tb = _default_tile(B, 8)       # batch tile (parallel grid axis)
    if tn is None:
        tn = _default_tile(N, 512)     # sequence tile (reduction grid axis)
    assert B % tb == 0 and N % tn == 0
    assert tb == B or tb % 8 == 0
    assert tn == N or tn % 8 == 0

    grid = (B // tb, N // tn)
    const2 = lambda i, j: (0, 0)       # resident weights/biases

    in_specs = [
        pl.BlockSpec((tb, tn, C), lambda i, j: (i, j, 0)),   # x (streamed)
        pl.BlockSpec((C, D), const2),                        # w1
        pl.BlockSpec((1, D), const2),                        # b1
        pl.BlockSpec((D, D), const2),                        # w2
        pl.BlockSpec((1, D), const2),                        # b2
        pl.BlockSpec((D, D), const2),                        # w3
        pl.BlockSpec((1, D), const2),                        # b3
        pl.BlockSpec((1, D), const2),                        # wf (row layout)
        pl.BlockSpec((1, 1), const2),                        # bf
    ]
    out_specs = pl.BlockSpec((tb, 1), lambda i, j: (i, 0))

    # Explicit VMEM budget: double-buffered x tiles + resident weights +
    # accumulator, with headroom, capped at 48 MiB (fits v7x's 64 MiB core).
    itemsize = jnp.dtype(x.dtype).itemsize
    x_bytes = 2 * tb * tn * C * itemsize
    w_bytes = 4 * (C * D + 2 * D * D + 4 * D + 1)
    acc_bytes = 4 * tb * C
    out_bytes = 2 * 4 * tb
    vmem_limit = int(min(max(2 * (x_bytes + w_bytes + acc_bytes + out_bytes),
                             16 * 1024 * 1024),
                         48 * 1024 * 1024))

    kernel = functools.partial(value_head_kernel, inv_n=1.0 / N)

    return pl.pallas_call(
        kernel,
        out_shape=jax.ShapeDtypeStruct((B, 1), jnp.float32),
        grid_spec=pltpu.PrefetchScalarGridSpec(
            num_scalar_prefetch=0,
            grid=grid,
            in_specs=in_specs,
            out_specs=out_specs,
            scratch_shapes=[pltpu.VMEM((tb, C), jnp.float32)],
        ),
        compiler_params=pltpu.CompilerParams(
            dimension_semantics=("parallel", "arbitrary"),
            vmem_limit_bytes=vmem_limit,
        ),
    )(x, params["w1"], params["b1"], params["w2"], params["b2"],
      params["w3"], params["b3"], params["wf"], params["bf"])


def init_params(key, c, d):
    """Deterministic synthetic init (PyTorch-style uniform fan-in bound)."""
    ks = jax.random.split(key, 8)

    def linear(kw, kb, fan_in, fan_out, w_shape=None):
        bound = 1.0 / jnp.sqrt(fan_in)
        shape = (fan_in, fan_out) if w_shape is None else w_shape
        w = jax.random.uniform(kw, shape, jnp.float32, -bound, bound)
        b = jax.random.uniform(kb, (1, fan_out), jnp.float32, -bound, bound)
        return w, b

    w1, b1 = linear(ks[0], ks[1], c, d)
    w2, b2 = linear(ks[2], ks[3], d, d)
    w3, b3 = linear(ks[4], ks[5], d, d)
    # Final layer stored as a lane-dense (1, d) row instead of (d, 1).
    wf, bf = linear(ks[6], ks[7], d, 1, w_shape=(1, d))
    return dict(w1=w1, b1=b1, w2=w2, b2=b2, w3=w3, b3=b3, wf=wf, bf=bf)


def value_head_ref(x, p):
    """Pure-JAX reference mirroring the PyTorch forward."""
    h = jnp.mean(x.astype(jnp.float32), axis=1)
    h = jnp.maximum(h @ p["w1"] + p["b1"], 0.0)
    h = jnp.maximum(h @ p["w2"] + p["b2"], 0.0)
    h = jnp.maximum(h @ p["w3"] + p["b3"], 0.0)
    return h @ p["wf"].T + p["bf"]


if __name__ == "__main__":
    key = jax.random.PRNGKey(0)
    k_x, k_p = jax.random.split(key)

    # Small but lane-dense shapes: batch=16, seq=32, c=d=128.
    B, N, C, D = 16, 32, 128, 128
    x = jax.random.normal(k_x, (B, N, C), jnp.float32)
    params = init_params(k_p, C, D)

    # tb=8, tn=8 -> grid (2, 4): parallel batch axis + multi-step N reduction.
    out = jax.block_until_ready(value_head(x, params, tb=8, tn=8))

    ref = value_head_ref(x, params)
    assert out.shape == (B, 1)
    assert jnp.allclose(out, ref, atol=1e-4, rtol=1e-4), (out, ref)
    print("KERNEL_OK")
</pallas_src>

<mosaic_0001>
module attributes {stable_mosaic.version = 11 : i64} {
  func.func @value_head_kernel(%arg0: i32, %arg1: i32, %arg2: memref<8x8x128xf32, #tpu.memory_space<vmem>>, %arg3: memref<128x128xf32, #tpu.memory_space<vmem>>, %arg4: memref<1x128xf32, #tpu.memory_space<vmem>>, %arg5: memref<128x128xf32, #tpu.memory_space<vmem>>, %arg6: memref<1x128xf32, #tpu.memory_space<vmem>>, %arg7: memref<128x128xf32, #tpu.memory_space<vmem>>, %arg8: memref<1x128xf32, #tpu.memory_space<vmem>>, %arg9: memref<1x128xf32, #tpu.memory_space<vmem>>, %arg10: memref<1x1xf32, #tpu.memory_space<vmem>>, %arg11: memref<8x1xf32, #tpu.memory_space<vmem>>, %arg12: memref<8x128xf32, #tpu.memory_space<vmem>>) attributes {dimension_semantics = [#tpu.dimension_semantics<parallel>, #tpu.dimension_semantics<arbitrary>], iteration_bounds = array<i64: 2, 4>, scalar_prefetch = 0 : i64, scratch_operands = 1 : i64, tpu.core_type = #tpu.core_type<tc>, window_params = [{transform_indices = @transform_0, window_bounds = array<i64: 8, 8, 128>}, {pipeline_mode = #tpu.pipeline_mode<synchronous>, transform_indices = @transform_1, window_bounds = array<i64: 128, 128>}, {pipeline_mode = #tpu.pipeline_mode<synchronous>, transform_indices = @transform_2, window_bounds = array<i64: 1, 128>}, {pipeline_mode = #tpu.pipeline_mode<synchronous>, transform_indices = @transform_3, window_bounds = array<i64: 128, 128>}, {pipeline_mode = #tpu.pipeline_mode<synchronous>, transform_indices = @transform_4, window_bounds = array<i64: 1, 128>}, {pipeline_mode = #tpu.pipeline_mode<synchronous>, transform_indices = @transform_5, window_bounds = array<i64: 128, 128>}, {pipeline_mode = #tpu.pipeline_mode<synchronous>, transform_indices = @transform_6, window_bounds = array<i64: 1, 128>}, {pipeline_mode = #tpu.pipeline_mode<synchronous>, transform_indices = @transform_7, window_bounds = array<i64: 1, 128>}, {pipeline_mode = #tpu.pipeline_mode<synchronous>, transform_indices = @transform_8, window_bounds = array<i64: 1, 1>}, {transform_indices = @transform_9, window_bounds = array<i64: 8, 1>}]} {
    %c0_i32 = arith.constant 0 : i32
    %0 = arith.cmpi eq, %arg1, %c0_i32 : i32
    %1 = arith.extui %0 : i1 to i32
    %c0_i32_0 = arith.constant 0 : i32
    %2 = arith.cmpi ne, %1, %c0_i32_0 : i32
    scf.if %2 {
      %cst_8 = arith.constant 0.000000e+00 : f32
      %11 = vector.broadcast %cst_8 : f32 to vector<8x128xf32>
      %c0_9 = arith.constant 0 : index
      %c0_10 = arith.constant 0 : index
      %12 = vector.load %arg12[%c0_9, %c0_10] : memref<8x128xf32, #tpu.memory_space<vmem>>, vector<8x128xf32>
      tpu.vector_store %arg12[%c0_9, %c0_10], %11 {strides = array<i32>} : memref<8x128xf32, #tpu.memory_space<vmem>>, vector<8x128xf32>,
    } else {
    }
    %c0 = arith.constant 0 : index
    %c0_1 = arith.constant 0 : index
    %3 = vector.load %arg12[%c0, %c0_1] : memref<8x128xf32, #tpu.memory_space<vmem>>, vector<8x128xf32>
    %c0_2 = arith.constant 0 : index
    %c0_3 = arith.constant 0 : index
    %c0_4 = arith.constant 0 : index
    %4 = vector.load %arg2[%c0_2, %c0_3, %c0_4] : memref<8x8x128xf32, #tpu.memory_space<vmem>>, vector<8x8x128xf32>
    %cst = arith.constant dense<0.000000e+00> : vector<8x128xf32>
    %5 = vector.multi_reduction <add>, %4, %cst [1] : vector<8x8x128xf32> to vector<8x128xf32>
    %6 = arith.addf %3, %5 : vector<8x128xf32>
    %c0_5 = arith.constant 0 : index
    %c0_6 = arith.constant 0 : index
    %7 = vector.load %arg12[%c0_5, %c0_6] : memref<8x128xf32, #tpu.memory_space<vmem>>, vector<8x128xf32>
    tpu.vector_store %arg12[%c0_5, %c0_6], %6 {strides = array<i32>} : memref<8x128xf32, #tpu.memory_space<vmem>>, vector<8x128xf32>,
    %c3_i32 = arith.constant 3 : i32
    %8 = arith.cmpi eq, %arg1, %c3_i32 : i32
    %9 = arith.extui %8 : i1 to i32
    %c0_i32_7 = arith.constant 0 : i32
    %10 = arith.cmpi ne, %9, %c0_i32_7 : i32
    scf.if %10 {
      %c0_8 = arith.constant 0 : index
      %c0_9 = arith.constant 0 : index
      %11 = vector.load %arg12[%c0_8, %c0_9] : memref<8x128xf32, #tpu.memory_space<vmem>>, vector<8x128xf32>
      %cst_10 = arith.constant 3.125000e-02 : f32
      %12 = vector.broadcast %cst_10 : f32 to vector<8x128xf32>
      %13 = arith.mulf %11, %12 : vector<8x128xf32>
      %c0_11 = arith.constant 0 : index
      %c0_12 = arith.constant 0 : index
      %14 = vector.load %arg3[%c0_11, %c0_12] : memref<128x128xf32, #tpu.memory_space<vmem>>, vector<128x128xf32>
      %cst_13 = arith.constant dense<0.000000e+00> : vector<8x128xf32>
      %15 = tpu.matmul %13, %14, %cst_13 {dimension_numbers = #tpu.dot_dimension_numbers<[1], [0], [0], [1], [0, 0, 1, 1], [], []>} : vector<8x128xf32>, vector<128x128xf32>, vector<8x128xf32> -> vector<8x128xf32>
      %c0_14 = arith.constant 0 : index
      %c0_15 = arith.constant 0 : index
      %16 = vector.load %arg4[%c0_14, %c0_15] : memref<1x128xf32, #tpu.memory_space<vmem>>, vector<1x128xf32>
      %17 = vector.broadcast %16 : vector<1x128xf32> to vector<8x128xf32>
      %18 = arith.addf %15, %17 : vector<8x128xf32>
      %cst_16 = arith.constant 0.000000e+00 : f32
      %19 = vector.broadcast %cst_16 : f32 to vector<8x128xf32>
      %20 = arith.maximumf %18, %19 : vector<8x128xf32>
      %c0_17 = arith.constant 0 : index
      %c0_18 = arith.constant 0 : index
      %21 = vector.load %arg5[%c0_17, %c0_18] : memref<128x128xf32, #tpu.memory_space<vmem>>, vector<128x128xf32>
      %cst_19 = arith.constant dense<0.000000e+00> : vector<8x128xf32>
      %22 = tpu.matmul %20, %21, %cst_19 {dimension_numbers = #tpu.dot_dimension_numbers<[1], [0], [0], [1], [0, 0, 1, 1], [], []>} : vector<8x128xf32>, vector<128x128xf32>, vector<8x128xf32> -> vector<8x128xf32>
      %c0_20 = arith.constant 0 : index
      %c0_21 = arith.constant 0 : index
      %23 = vector.load %arg6[%c0_20, %c0_21] : memref<1x128xf32, #tpu.memory_space<vmem>>, vector<1x128xf32>
      %24 = vector.broadcast %23 : vector<1x128xf32> to vector<8x128xf32>
      %25 = arith.addf %22, %24 : vector<8x128xf32>
      %cst_22 = arith.constant 0.000000e+00 : f32
      %26 = vector.broadcast %cst_22 : f32 to vector<8x128xf32>
      %27 = arith.maximumf %25, %26 : vector<8x128xf32>
      %c0_23 = arith.constant 0 : index
      %c0_24 = arith.constant 0 : index
      %28 = vector.load %arg7[%c0_23, %c0_24] : memref<128x128xf32, #tpu.memory_space<vmem>>, vector<128x128xf32>
      %cst_25 = arith.constant dense<0.000000e+00> : vector<8x128xf32>
      %29 = tpu.matmul %27, %28, %cst_25 {dimension_numbers = #tpu.dot_dimension_numbers<[1], [0], [0], [1], [0, 0, 1, 1], [], []>} : vector<8x128xf32>, vector<128x128xf32>, vector<8x128xf32> -> vector<8x128xf32>
      %c0_26 = arith.constant 0 : index
      %c0_27 = arith.constant 0 : index
      %30 = vector.load %arg8[%c0_26, %c0_27] : memref<1x128xf32, #tpu.memory_space<vmem>>, vector<1x128xf32>
      %31 = vector.broadcast %30 : vector<1x128xf32> to vector<8x128xf32>
      %32 = arith.addf %29, %31 : vector<8x128xf32>
      %cst_28 = arith.constant 0.000000e+00 : f32
      %33 = vector.broadcast %cst_28 : f32 to vector<8x128xf32>
      %34 = arith.maximumf %32, %33 : vector<8x128xf32>
      %c0_29 = arith.constant 0 : index
      %c0_30 = arith.constant 0 : index
      %35 = vector.load %arg9[%c0_29, %c0_30] : memref<1x128xf32, #tpu.memory_space<vmem>>, vector<1x128xf32>
      %36 = vector.broadcast %35 : vector<1x128xf32> to vector<8x128xf32>
      %37 = arith.mulf %34, %36 : vector<8x128xf32>
      %cst_31 = arith.constant dense<0.000000e+00> : vector<8xf32>
      %38 = vector.multi_reduction <add>, %37, %cst_31 [1] : vector<8x128xf32> to vector<8xf32>
      %39 = vector.shape_cast %38 : vector<8xf32> to vector<8x1xf32>
      %c0_32 = arith.constant 0 : index
      %c0_33 = arith.constant 0 : index
      %40 = vector.load %arg10[%c0_32, %c0_33] : memref<1x1xf32, #tpu.memory_space<vmem>>, vector<1x1xf32>
      %41 = vector.broadcast %40 : vector<1x1xf32> to vector<8x1xf32>
      %42 = arith.addf %39, %41 : vector<8x1xf32>
      %c0_34 = arith.constant 0 : index
      %c0_35 = arith.constant 0 : index
      %43 = vector.load %arg11[%c0_34, %c0_35] : memref<8x1xf32, #tpu.memory_space<vmem>>, vector<8x1xf32>
      tpu.vector_store %arg11[%c0_34, %c0_35], %42 {strides = array<i32>} : memref<8x1xf32, #tpu.memory_space<vmem>>, vector<8x1xf32>,
    } else {
    }
    return
  }
  func.func @transform_0(%arg0: i32, %arg1: i32) -> (i32, i32, i32) {
    %c0_i32 = arith.constant 0 : i32
    %c0_i32_0 = arith.constant 0 : i32
    return %arg0, %arg1, %c0_i32 : i32, i32, i32
  }
  func.func @transform_1(%arg0: i32, %arg1: i32) -> (i32, i32) {
    %c0_i32 = arith.constant 0 : i32
    %c0_i32_0 = arith.constant 0 : i32
    %c0_i32_1 = arith.constant 0 : i32
    return %c0_i32, %c0_i32_0 : i32, i32
  }
  func.func @transform_2(%arg0: i32, %arg1: i32) -> (i32, i32) {
    %c0_i32 = arith.constant 0 : i32
    %c0_i32_0 = arith.constant 0 : i32
    %c0_i32_1 = arith.constant 0 : i32
    return %c0_i32, %c0_i32_0 : i32, i32
  }
  func.func @transform_3(%arg0: i32, %arg1: i32) -> (i32, i32) {
    %c0_i32 = arith.constant 0 : i32
    %c0_i32_0 = arith.constant 0 : i32
    %c0_i32_1 = arith.constant 0 : i32
    return %c0_i32, %c0_i32_0 : i32, i32
  }
  func.func @transform_4(%arg0: i32, %arg1: i32) -> (i32, i32) {
    %c0_i32 = arith.constant 0 : i32
    %c0_i32_0 = arith.constant 0 : i32
    %c0_i32_1 = arith.constant 0 : i32
    return %c0_i32, %c0_i32_0 : i32, i32
  }
  func.func @transform_5(%arg0: i32, %arg1: i32) -> (i32, i32) {
    %c0_i32 = arith.constant 0 : i32
    %c0_i32_0 = arith.constant 0 : i32
    %c0_i32_1 = arith.constant 0 : i32
    return %c0_i32, %c0_i32_0 : i32, i32
  }
  func.func @transform_6(%arg0: i32, %arg1: i32) -> (i32, i32) {
    %c0_i32 = arith.constant 0 : i32
    %c0_i32_0 = arith.constant 0 : i32
    %c0_i32_1 = arith.constant 0 : i32
    return %c0_i32, %c0_i32_0 : i32, i32
  }
  func.func @transform_7(%arg0: i32, %arg1: i32) -> (i32, i32) {
    %c0_i32 = arith.constant 0 : i32
    %c0_i32_0 = arith.constant 0 : i32
    %c0_i32_1 = arith.constant 0 : i32
    return %c0_i32, %c0_i32_0 : i32, i32
  }
  func.func @transform_8(%arg0: i32, %arg1: i32) -> (i32, i32) {
    %c0_i32 = arith.constant 0 : i32
    %c0_i32_0 = arith.constant 0 : i32
    %c0_i32_1 = arith.constant 0 : i32
    return %c0_i32, %c0_i32_0 : i32, i32
  }
  func.func @transform_9(%arg0: i32, %arg1: i32) -> (i32, i32) {
    %c0_i32 = arith.constant 0 : i32
    %c0_i32_0 = arith.constant 0 : i32
    return %arg0, %c0_i32 : i32, i32
  }
}

</mosaic_0001>

<llo_original>
// kernel: tpu_custom_call.1
$region0: #{tpu_custom_call.1}
  #allocation0 [shape = 'u32[]', space=smem, size = 0x4, offset = 0x4, fixed_abs, tag = 'smem constant byte address 0x4 - core index']
  #allocation1 [shape = 'u32[144,128]{1,0:T(1,128)}', space=vmem, size = 0x12000, scoped, tag = 'internal scratch']
  #allocation2 [shape = 'f32[8,128]{1,0:T(8,128)}', space=vmem, size = 0x1000, scoped, tag = 'scratch operand']
  #allocation3 [shape = 'f32[1,1]{1,0:T(1,128)S(1)}', space=vmem, size = 0x200, scoped, tag = 'scoped memory for tpu_custom_call.1']
  %s0 = inlined_call_operand.hbm [shape: f32[16,32,128], index: 0, kind: input, shape index: {}]
  %s1 = inlined_call_operand.hbm [shape: f32[128,128], index: 1, kind: input, shape index: {}]
  %s2 = inlined_call_operand.vmem [shape: f32[1,128], index: 2, kind: input, shape index: {}]
  %s3 = inlined_call_operand.hbm [shape: f32[128,128], index: 3, kind: input, shape index: {}]
  %s4 = inlined_call_operand.vmem [shape: f32[1,128], index: 4, kind: input, shape index: {}]
  %s5 = inlined_call_operand.hbm [shape: f32[128,128], index: 5, kind: input, shape index: {}]
  %s6 = inlined_call_operand.vmem [shape: f32[1,128], index: 6, kind: input, shape index: {}]
  %s7 = inlined_call_operand.vmem [shape: f32[1,128], index: 7, kind: input, shape index: {}]
  %s8 = inlined_call_operand.<no memory space> [shape: f32[1,1], index: 8, kind: input, shape index: {}]
  %s9 = inlined_call_operand.vmem [shape: f32[16,1], index: 9, kind: output, shape index: {}]
  %s10 = sld [smem:[#allocation0]]
  $region93: #{tpu_custom_call.1} parent=0
    _
  %s12 = ssub.s32 1, %s10
  %s13 = scalar_select 0, %s12, %s10
  %v14 = vstv %s8
  %15 = vst [vmem:[#allocation3] sm:$0x1] %v14
  $region1: #{tpu_custom_call.1} parent=0
    #allocation4 [shape = 'u8[65536]{0}', space=vmem, size = 0x10000, scoped, tag = 'input window, operand 0']
    #allocation5 [shape = 's32[2]{0}', space=sflag, size = 0x8, scoped, tag = 'scoped memory for tpu_custom_call.1']
    #allocation6 [shape = 'u8[65536]{0}', space=vmem, size = 0x10000, scoped, tag = 'input window, operand 1, single buffered']
    #allocation7 [shape = 's32[1]{0}', space=sflag, size = 0x4, scoped, tag = 'scoped memory for tpu_custom_call.1']
    #allocation8 [shape = 'u8[65536]{0}', space=vmem, size = 0x10000, scoped, tag = 'input window, operand 3, single buffered']
    #allocation9 [shape = 'u8[65536]{0}', space=vmem, size = 0x10000, scoped, tag = 'input window, operand 5, single buffered']
    #allocation10 [shape = 's32[1]{0}', space=sflag, size = 0x4, scoped, tag = 'scoped memory for tpu_custom_call.1']
    %16 = vsyncpa [#allocation5], 0
    %s17 = scalar_lea.sflag [#allocation5], 1
    %18 = vsyncpa %s17, 0
    %19 = vsyncpa [#allocation7], 0
    %20 = vsyncpa [#allocation10], 0
    loop: start=0, step=1, limit=10
    $region2: #{tpu_custom_call.1} parent=1 // loop_pre_header
      _
    $region3: #{tpu_custom_call.1} parent=1 // loop_header
      %s22 = sphi 0, %s26
      %p23 = scmp.ge.s32.totalorder %s22, 10
      %s29 = sphi 0, %s41
      %s30 = sphi 0, %s37
      %s31 = sphi 0, %s29
      %s32 = sphi 0, %s30
      %s33 = sphi 0, %s31
      %s34 = sphi 0, %s32
      %s46 = sphi 0, %s48
      %s49 = sphi 0, %s46
      %s50 = sphi 0, %s49
      %s66 = sphi 0, %s50
      %s70 = sphi 0, %s70
      %s72 = sphi 0, %s70
      %s73 = sphi 0, %s72
      %s87 = sphi 0, %s73
      %s91 = sphi 0, %s91
      %s93 = sphi 0, %s91
      %s94 = sphi 0, %s93
      %s108 = sphi 0, %s94
      %s112 = sphi 0, %s112
      %s114 = sphi 0, %s112
      %s115 = sphi 0, %s114
      %s129 = sphi 0, %s115
      %s133 = sphi 0, %s133
      %s135 = sphi 0, %s133
      %s136 = sphi 0, %s135
      %s150 = sphi 0, %s136
      %s154 = sphi 0, %s154
      %s156 = sphi 0, %s154
      %s157 = sphi 0, %s156
      %s171 = sphi 0, %s157
      %s175 = sphi 0, %s175
      %s177 = sphi 0, %s175
      %s178 = sphi 0, %s177
      %s192 = sphi 0, %s178
      %s196 = sphi 0, %s196
      %s198 = sphi 0, %s196
      %s199 = sphi 0, %s198
      %s213 = sphi 0, %s199
      %s217 = sphi 0, %s217
      %s219 = sphi 0, %s217
      %s220 = sphi 0, %s219
      %s234 = sphi 0, %s220
      %s240 = sphi 0, %s242
      %s243 = sphi 0, %s240
      %s244 = sphi 0, %s243
      %s260 = sphi 0, %s244
    $region4: #{tpu_custom_call.1} parent=1 // loop_header_branch
      %25 = sbr.rel (%p23) target = $region8
    $region5: #{tpu_custom_call.1} parent=1 // loop_body
      %s27 = ssub.s32 %s22, 1
      %s28 = ssub.s32 %s22, 2
      %s35 = sadd.s32 1, %s30
      %p36 = scmp.ge.s32.totalorder %s35, 4
      %s37 = scalar_select %p36, 0, %s35
      %s38 = sadd.s32 1, %s29
      %s39 = scalar_select %p36, %s38, %s29
      %p40 = scmp.ge.s32.totalorder %s39, 2
      %s41 = scalar_select %p40, 0, %s39
      %s42 = ssub.s32 %s29, %s41
      %s43 = ssub.s32 %s30, %s37
      %s44 = sor.u32 %s42, %s43
      %p45 = scmp.eq.s32.totalorder %s44, 0
      %s47 = sadd.s32 %s46, 1
      %s48 = scalar_select %p45, %s46, %s47
      %p51 = pneg %p45
      %p52 = scmp.eq.s32.totalorder %s22, 7
      %p53 = por %p51, %p52
      %p54 = scmp.ne.s32.totalorder %s46, %s49
      %p55 = scmp.eq.s32.totalorder %s22, 0
      %p56 = por %p54, %p55
      %p57 = scmp.ne.s32.totalorder %s46, %s49
      %p58 = scmp.eq.s32.totalorder %s27, 7
      %p59 = por %p57, %p58
      %p60 = scmp.ne.s32.totalorder %s49, %s50
      %p61 = scmp.eq.s32.totalorder %s27, 0
      %p62 = por %p60, %p61
      %p63 = scmp.ne.s32.totalorder %s49, %s50
      %p64 = scmp.eq.s32.totalorder %s28, 7
      %p65 = por %p63, %p64
      %p67 = scmp.ne.s32.totalorder %s50, %s66
      %p68 = scmp.eq.s32.totalorder %s28, 0
      %p69 = por %p67, %p68
      %s71 = sadd.s32 %s70, 1
      %p74 = scmp.eq.s32.totalorder %s22, 7
      %p75 = scmp.ne.s32.totalorder %s70, %s72
      %p76 = scmp.eq.s32.totalorder %s22, 0
      %p77 = por %p75, %p76
      %p78 = scmp.ne.s32.totalorder %s70, %s72
      %p79 = scmp.eq.s32.totalorder %s27, 7
      %p80 = por %p78, %p79
      %p81 = scmp.ne.s32.totalorder %s72, %s73
      %p82 = scmp.eq.s32.totalorder %s27, 0
      %p83 = por %p81, %p82
      %p84 = scmp.ne.s32.totalorder %s72, %s73
      %p85 = scmp.eq.s32.totalorder %s28, 7
      %p86 = por %p84, %p85
      %p88 = scmp.ne.s32.totalorder %s73, %s87
      %p89 = scmp.eq.s32.totalorder %s28, 0
      %p90 = por %p88, %p89
      %s92 = sadd.s32 %s91, 1
      %p95 = scmp.eq.s32.totalorder %s22, 7
      %p96 = scmp.ne.s32.totalorder %s91, %s93
      %p97 = scmp.eq.s32.totalorder %s22, 0
      %p98 = por %p96, %p97
      %p99 = scmp.ne.s32.totalorder %s91, %s93
      %p100 = scmp.eq.s32.totalorder %s27, 7
      %p101 = por %p99, %p100
      %p102 = scmp.ne.s32.totalorder %s93, %s94
      %p103 = scmp.eq.s32.totalorder %s27, 0
      %p104 = por %p102, %p103
      %p105 = scmp.ne.s32.totalorder %s93, %s94
      %p106 = scmp.eq.s32.totalorder %s28, 7
      %p107 = por %p105, %p106
      %p109 = scmp.ne.s32.totalorder %s94, %s108
      %p110 = scmp.eq.s32.totalorder %s28, 0
      %p111 = por %p109, %p110
      %s113 = sadd.s32 %s112, 1
      %p116 = scmp.eq.s32.totalorder %s22, 7
      %p117 = scmp.ne.s32.totalorder %s112, %s114
      %p118 = scmp.eq.s32.totalorder %s22, 0
      %p119 = por %p117, %p118
      %p120 = scmp.ne.s32.totalorder %s112, %s114
      %p121 = scmp.eq.s32.totalorder %s27, 7
      %p122 = por %p120, %p121
      %p123 = scmp.ne.s32.totalorder %s114, %s115
      %p124 = scmp.eq.s32.totalorder %s27, 0
      %p125 = por %p123, %p124
      %p126 = scmp.ne.s32.totalorder %s114, %s115
      %p127 = scmp.eq.s32.totalorder %s28, 7
      %p128 = por %p126, %p127
      %p130 = scmp.ne.s32.totalorder %s115, %s129
      %p131 = scmp.eq.s32.totalorder %s28, 0
      %p132 = por %p130, %p131
      %s134 = sadd.s32 %s133, 1
      %p137 = scmp.eq.s32.totalorder %s22, 7
      %p138 = scmp.ne.s32.totalorder %s133, %s135
      %p139 = scmp.eq.s32.totalorder %s22, 0
      %p140 = por %p138, %p139
      %p141 = scmp.ne.s32.totalorder %s133, %s135
      %p142 = scmp.eq.s32.totalorder %s27, 7
      %p143 = por %p141, %p142
      %p144 = scmp.ne.s32.totalorder %s135, %s136
      %p145 = scmp.eq.s32.totalorder %s27, 0
      %p146 = por %p144, %p145
      %p147 = scmp.ne.s32.totalorder %s135, %s136
      %p148 = scmp.eq.s32.totalorder %s28, 7
      %p149 = por %p147, %p148
      %p151 = scmp.ne.s32.totalorder %s136, %s150
      %p152 = scmp.eq.s32.totalorder %s28, 0
      %p153 = por %p151, %p152
      %s155 = sadd.s32 %s154, 1
      %p158 = scmp.eq.s32.totalorder %s22, 7
      %p159 = scmp.ne.s32.totalorder %s154, %s156
      %p160 = scmp.eq.s32.totalorder %s22, 0
      %p161 = por %p159, %p160
      %p162 = scmp.ne.s32.totalorder %s154, %s156
      %p163 = scmp.eq.s32.totalorder %s27, 7
      %p164 = por %p162, %p163
      %p165 = scmp.ne.s32.totalorder %s156, %s157
      %p166 = scmp.eq.s32.totalorder %s27, 0
      %p167 = por %p165, %p166
      %p168 = scmp.ne.s32.totalorder %s156, %s157
      %p169 = scmp.eq.s32.totalorder %s28, 7
      %p170 = por %p168, %p169
      %p172 = scmp.ne.s32.totalorder %s157, %s171
      %p173 = scmp.eq.s32.totalorder %s28, 0
      %p174 = por %p172, %p173
      %s176 = sadd.s32 %s175, 1
      %p179 = scmp.eq.s32.totalorder %s22, 7
      %p180 = scmp.ne.s32.totalorder %s175, %s177
      %p181 = scmp.eq.s32.totalorder %s22, 0
      %p182 = por %p180, %p181
      %p183 = scmp.ne.s32.totalorder %s175, %s177
      %p184 = scmp.eq.s32.totalorder %s27, 7
      %p185 = por %p183, %p184
      %p186 = scmp.ne.s32.totalorder %s177, %s178
      %p187 = scmp.eq.s32.totalorder %s27, 0
      %p188 = por %p186, %p187
      %p189 = scmp.ne.s32.totalorder %s177, %s178
      %p190 = scmp.eq.s32.totalorder %s28, 7
      %p191 = por %p189, %p190
      %p193 = scmp.ne.s32.totalorder %s178, %s192
      %p194 = scmp.eq.s32.totalorder %s28, 0
      %p195 = por %p193, %p194
      %s197 = sadd.s32 %s196, 1
      %p200 = scmp.eq.s32.totalorder %s22, 7
      %p201 = scmp.ne.s32.totalorder %s196, %s198
      %p202 = scmp.eq.s32.totalorder %s22, 0
      %p203 = por %p201, %p202
      %p204 = scmp.ne.s32.totalorder %s196, %s198
      %p205 = scmp.eq.s32.totalorder %s27, 7
      %p206 = por %p204, %p205
      %p207 = scmp.ne.s32.totalorder %s198, %s199
      %p208 = scmp.eq.s32.totalorder %s27, 0
      %p209 = por %p207, %p208
      %p210 = scmp.ne.s32.totalorder %s198, %s199
      %p211 = scmp.eq.s32.totalorder %s28, 7
      %p212 = por %p210, %p211
      %p214 = scmp.ne.s32.totalorder %s199, %s213
      %p215 = scmp.eq.s32.totalorder %s28, 0
      %p216 = por %p214, %p215
      %s218 = sadd.s32 %s217, 1
      %p221 = scmp.eq.s32.totalorder %s22, 7
      %p222 = scmp.ne.s32.totalorder %s217, %s219
      %p223 = scmp.eq.s32.totalorder %s22, 0
      %p224 = por %p222, %p223
      %p225 = scmp.ne.s32.totalorder %s217, %s219
      %p226 = scmp.eq.s32.totalorder %s27, 7
      %p227 = por %p225, %p226
      %p228 = scmp.ne.s32.totalorder %s219, %s220
      %p229 = scmp.eq.s32.totalorder %s27, 0
      %p230 = por %p228, %p229
      %p231 = scmp.ne.s32.totalorder %s219, %s220
      %p232 = scmp.eq.s32.totalorder %s28, 7
      %p233 = por %p231, %p232
      %p235 = scmp.ne.s32.totalorder %s220, %s234
      %p236 = scmp.eq.s32.totalorder %s28, 0
      %p237 = por %p235, %p236
      %s238 = ssub.s32 %s29, %s41
      %p239 = scmp.eq.s32.totalorder %s238, 0
      %s241 = sadd.s32 %s240, 1
      %s242 = scalar_select %p239, %s240, %s241
      %p245 = pneg %p239
      %p246 = scmp.eq.s32.totalorder %s22, 7
      %p247 = por %p245, %p246
      %p248 = scmp.ne.s32.totalorder %s240, %s243
      %p249 = scmp.eq.s32.totalorder %s22, 0
      %p250 = por %p248, %p249
      %p251 = scmp.ne.s32.totalorder %s240, %s243
      %p252 = scmp.eq.s32.totalorder %s27, 7
      %p253 = por %p251, %p252
      %p254 = scmp.ne.s32.totalorder %s243, %s244
      %p255 = scmp.eq.s32.totalorder %s27, 0
      %p256 = por %p254, %p255
      %p257 = scmp.ne.s32.totalorder %s243, %s244
      %p258 = scmp.eq.s32.totalorder %s28, 7
      %p259 = por %p257, %p258
      %p261 = scmp.ne.s32.totalorder %s244, %s260
      %p262 = scmp.eq.s32.totalorder %s28, 0
      %p263 = por %p261, %p262
      %p264 = scmp.le.s32.totalorder 1, %s22
      %p265 = scmp.lt.s32.totalorder %s22, 9
      %p266 = pnand %p264, %p265
      %p267 = pneg %p266
      // Predicated region
      $region9: #{tpu_custom_call.1} parent=5 // pred_check
        _
      $region10: #{tpu_custom_call.1} parent=5 // pred_check_branch
        %269 = sbr.rel (%p266) target = $region12
      $region11: #{tpu_custom_call.1} parent=5 // pred_region
        %s270 = ssub.s32 %s22, 1
        // Predicated region
        $region13: #{tpu_custom_call.1} parent=11 // pred_check
          %p271 = pneg %p83
        $region14: #{tpu_custom_call.1} parent=11 // pred_check_branch
          %273 = sbr.rel (%p271) target = $region16
        $region15: #{tpu_custom_call.1} parent=11 // pred_region
          %s275 = ssub.s32 2048, 2048
          %276 = vsyncadd [#allocation7], %s275
          %s277 = sshll.u32 [#allocation6], 4
          %s278 = int_to_ptr.vmem [resolvable:$true] %s277
          %283 = dma.hbm_to_vmem [thread:$0]  %s1, 2048, %s278, [#allocation7], 128, 128, 8
        $region16: #{tpu_custom_call.1} parent=11 // pred_fallthru
          _
        // Predicated region
        $region17: #{tpu_custom_call.1} parent=11 // pred_check
          %p284 = pneg %p104
        $region18: #{tpu_custom_call.1} parent=11 // pred_check_branch
          %286 = sbr.rel (%p284) target = $region20
        $region19: #{tpu_custom_call.1} parent=11 // pred_region
          _
        $region20: #{tpu_custom_call.1} parent=11 // pred_fallthru
          _
        // Predicated region
        $region21: #{tpu_custom_call.1} parent=11 // pred_check
          %p287 = pneg %p125
        $region22: #{tpu_custom_call.1} parent=11 // pred_check_branch
          %289 = sbr.rel (%p287) target = $region24
        $region23: #{tpu_custom_call.1} parent=11 // pred_region
          %s291 = ssub.s32 2048, 2048
          %292 = vsyncadd [#allocation7], %s291
          %s293 = sshll.u32 [#allocation8], 4
          %s294 = int_to_ptr.vmem [resolvable:$true] %s293
          %299 = dma.hbm_to_vmem [thread:$0]  %s3, 2048, %s294, [#allocation7], 128, 128, 8
        $region24: #{tpu_custom_call.1} parent=11 // pred_fallthru
          _
        // Predicated region
        $region25: #{tpu_custom_call.1} parent=11 // pred_check
          %p300 = pneg %p146
        $region26: #{tpu_custom_call.1} parent=11 // pred_check_branch
          %302 = sbr.rel (%p300) target = $region28
        $region27: #{tpu_custom_call.1} parent=11 // pred_region
          _
        $region28: #{tpu_custom_call.1} parent=11 // pred_fallthru
          _
        // Predicated region
        $region29: #{tpu_custom_call.1} parent=11 // pred_check
          %p303 = pneg %p167
        $region30: #{tpu_custom_call.1} parent=11 // pred_check_branch
          %305 = sbr.rel (%p303) target = $region32
        $region31: #{tpu_custom_call.1} parent=11 // pred_region
          %s307 = ssub.s32 2048, 2048
          %308 = vsyncadd [#allocation10], %s307
          %s309 = sshll.u32 [#allocation9], 4
          %s310 = int_to_ptr.vmem [resolvable:$true] %s309
          %315 = dma.hbm_to_vmem [thread:$0]  %s5, 2048, %s310, [#allocation10], 128, 128, 8
        $region32: #{tpu_custom_call.1} parent=11 // pred_fallthru
          _
        // Predicated region
        $region33: #{tpu_custom_call.1} parent=11 // pred_check
          %p316 = pneg %p188
        $region34: #{tpu_custom_call.1} parent=11 // pred_check_branch
          %318 = sbr.rel (%p316) target = $region36
        $region35: #{tpu_custom_call.1} parent=11 // pred_region
          _
        $region36: #{tpu_custom_call.1} parent=11 // pred_fallthru
          _
        // Predicated region
        $region37: #{tpu_custom_call.1} parent=11 // pred_check
          %p319 = pneg %p209
        $region38: #{tpu_custom_call.1} parent=11 // pred_check_branch
          %321 = sbr.rel (%p319) target = $region40
        $region39: #{tpu_custom_call.1} parent=11 // pred_region
          _
        $region40: #{tpu_custom_call.1} parent=11 // pred_fallthru
          _
        // Predicated region
        $region41: #{tpu_custom_call.1} parent=11 // pred_check
          %p322 = pneg %p230
        $region42: #{tpu_custom_call.1} parent=11 // pred_check_branch
          %324 = sbr.rel (%p322) target = $region44
        $region43: #{tpu_custom_call.1} parent=11 // pred_region
          _
        $region44: #{tpu_custom_call.1} parent=11 // pred_fallthru
          _
      $region12: #{tpu_custom_call.1} parent=5 // pred_fallthru
        _
      %p325 = scmp.lt.s32.totalorder %s22, 8
      // Predicated region
      $region45: #{tpu_custom_call.1} parent=5 // pred_check
        %p326 = pneg %p325
      $region46: #{tpu_custom_call.1} parent=5 // pred_check_branch
        %328 = sbr.rel (%p326) target = $region48
      $region47: #{tpu_custom_call.1} parent=5 // pred_region
        // Predicated region
        $region49: #{tpu_custom_call.1} parent=47 // pred_check
          %p329 = pneg %p56
        $region50: #{tpu_custom_call.1} parent=47 // pred_check_branch
          %331 = sbr.rel (%p329) target = $region52
        $region51: #{tpu_custom_call.1} parent=47 // pred_region
          %s332 = sand.u32 %s46, 1
          %s333 = scalar_lea.sflag [#allocation5], %s332
          %s334 = sand.u32 %s46, 1
          %s335 = smul.addr %s334, 64
          %s336 = scalar_lea.vmem [#allocation4], %s335
          %s337 = smul.u32 8, %s29
          %s339 = ssub.s32 1024, 1024
          %340 = vsyncadd %s333, %s339
          %s341 = smul.addr %s337, 4
          %s342 = sadd.s32 %s30, %s341
          %s343 = smul.addr %s342, 128
          %s344 = scalar_lea.hbm %s0, %s343
          %s345 = sshll.u32 %s336, 4
          %s346 = int_to_ptr.vmem [resolvable:$true] %s345
          %351 = dma.hbm_to_vmem [thread:$0]  %s344, 1024, %s346, %s333, 512, 128, 8
        $region52: #{tpu_custom_call.1} parent=47 // pred_fallthru
          _
      $region48: #{tpu_custom_call.1} parent=5 // pred_fallthru
        _
      %p352 = scmp.le.s32.totalorder 1, %s22
      %p353 = scmp.lt.s32.totalorder %s22, 9
      %p354 = pnand %p352, %p353
      %p355 = pneg %p354
      // Predicated region
      $region53: #{tpu_custom_call.1} parent=5 // pred_check
        _
      $region54: #{tpu_custom_call.1} parent=5 // pred_check_branch
        %357 = sbr.rel (%p354) target = $region56
      $region55: #{tpu_custom_call.1} parent=5 // pred_region
        %s358 = ssub.s32 %s22, 1
        %s359 = sand.u32 %s49, 1
        %s360 = scalar_lea.sflag [#allocation5], %s359
        %s361 = sand.u32 %s49, 1
        %s362 = smul.addr %s361, 64
        %s363 = scalar_lea.vmem [#allocation4], %s362
        // Predicated region
        $region57: #{tpu_custom_call.1} parent=55 // pred_check
          %p364 = pneg %p62
        $region58: #{tpu_custom_call.1} parent=55 // pred_check_branch
          %366 = sbr.rel (%p364) target = $region60
        $region59: #{tpu_custom_call.1} parent=55 // pred_region
          %367 = dma.done %s360, 1024
        $region60: #{tpu_custom_call.1} parent=55 // pred_fallthru
          _
        // Predicated region
        $region61: #{tpu_custom_call.1} parent=55 // pred_check
          %p368 = pneg %p83
        $region62: #{tpu_custom_call.1} parent=55 // pred_check_branch
          %370 = sbr.rel (%p368) target = $region64
        $region63: #{tpu_custom_call.1} parent=55 // pred_region
          %371 = dma.done [#allocation7], 2048
        $region64: #{tpu_custom_call.1} parent=55 // pred_fallthru
          _
        // Predicated region
        $region65: #{tpu_custom_call.1} parent=55 // pred_check
          %p372 = pneg %p125
        $region66: #{tpu_custom_call.1} parent=55 // pred_check_branch
          %374 = sbr.rel (%p372) target = $region68
        $region67: #{tpu_custom_call.1} parent=55 // pred_region
          %375 = dma.done [#allocation7], 2048
        $region68: #{tpu_custom_call.1} parent=55 // pred_fallthru
          _
        // Predicated region
        $region69: #{tpu_custom_call.1} parent=55 // pred_check
          %p376 = pneg %p167
        $region70: #{tpu_custom_call.1} parent=55 // pred_check_branch
          %378 = sbr.rel (%p376) target = $region72
        $region71: #{tpu_custom_call.1} parent=55 // pred_region
          %379 = dma.done [#allocation10], 2048
        $region72: #{tpu_custom_call.1} parent=55 // pred_fallthru
          _
        %s380 = sand.u32 %s49, 1
        %s381 = scalar_lea.sflag [#allocation5], %s380
        %s382 = sand.u32 %s49, 1
        %s383 = smul.addr %s382, 64
        %s384 = scalar_lea.vmem [#allocation4], %s383
        %p385 = pneg %p62
        %p386 = pneg %p59
        %p387 = pneg %p83
        %p388 = pneg %p80
        %p389 = pneg %p104
        %p390 = pneg %p101
        %p391 = pneg %p125
        %p392 = pneg %p122
        %p393 = pneg %p146
        %p394 = pneg %p143
        %p395 = pneg %p167
        %p396 = pneg %p164
        %p397 = pneg %p188
        %p398 = pneg %p185
        %p399 = pneg %p209
        %p400 = pneg %p206
        %p401 = pneg %p230
        %p402 = pneg %p227
        %p403 = pneg %p256
        %p404 = pneg %p253
        %p405 = scmp.lt.s32.totalorder %s31, 1
        %s406 = scalar_select %p405, %s31, 1
        %s407 = smul.addr %s406, 8
        %s408 = scalar_lea.vmem %s9, %s407
        %s409 = smul.u32 8, %s31
        %p410 = scmp.lt.s32.totalorder %s31, 1
        %s411 = scalar_select %p410, %s31, 1
        %s412 = smul.addr %s411, 8
        %s413 = scalar_lea.vmem %s9, %s412
        %p414 = scmp.eq.s32.totalorder %s32, 0
        // Predicated region
        $region73: #{tpu_custom_call.1} parent=55 // pred_check
          %p415 = pneg %p414
        $region74: #{tpu_custom_call.1} parent=55 // pred_check_branch
          %417 = sbr.rel (%p415) target = $region76
        $region75: #{tpu_custom_call.1} parent=55 // pred_region
          %418 = vst [vmem:[#allocation2] sm:$0xff] 0.0
        $region76: #{tpu_custom_call.1} parent=55 // pred_fallthru
          _
        %v419 = vld [vmem:[#allocation2] sm:$0xff]
        %v420 = vld [vmem:[%s363] sm:$0xff]
        %v421 = vld [vmem:[%s363 + $0x8] sm:$0xff]
        %v422 = vld [vmem:[%s363 + $0x10] sm:$0xff]
        %v423 = vld [vmem:[%s363 + $0x18] sm:$0xff]
        %v424 = vld [vmem:[%s363 + $0x20] sm:$0xff]
        %v425 = vld [vmem:[%s363 + $0x28] sm:$0xff]
        %v426 = vld [vmem:[%s363 + $0x30] sm:$0xff]
        %v427 = vld [vmem:[%s363 + $0x38] sm:$0xff]
        %v428 = vrot.slane %v420, 4
        %v429 = vadd.f32 %v420, %v428
        %v430 = vrot.slane %v429, 2
        %v431 = vadd.f32 %v429, %v430
        %v432 = vrot.slane %v431, 1
        %v433 = vadd.f32 %v431, %v432
        %v434 = vrot.slane %v421, 4
        %v435 = vadd.f32 %v421, %v434
        %v436 = vrot.slane %v435, 2
        %v437 = vadd.f32 %v435, %v436
        %v438 = vrot.slane %v437, 1
        %v439 = vadd.f32 %v437, %v438
        %v440 = vrot.slane %v422, 4
        %v441 = vadd.f32 %v422, %v440
        %v442 = vrot.slane %v441, 2
        %v443 = vadd.f32 %v441, %v442
        %v444 = vrot.slane %v443, 1
        %v445 = vadd.f32 %v443, %v444
        %v446 = vrot.slane %v423, 4
        %v447 = vadd.f32 %v423, %v446
        %v448 = vrot.slane %v447, 2
        %v449 = vadd.f32 %v447, %v448
        %v450 = vrot.slane %v449, 1
        %v451 = vadd.f32 %v449, %v450
        %v452 = vrot.slane %v424, 4
        %v453 = vadd.f32 %v424, %v452
        %v454 = vrot.slane %v453, 2
        %v455 = vadd.f32 %v453, %v454
        %v456 = vrot.slane %v455, 1
        %v457 = vadd.f32 %v455, %v456
        %v458 = vrot.slane %v425, 4
        %v459 = vadd.f32 %v425, %v458
        %v460 = vrot.slane %v459, 2
        %v461 = vadd.f32 %v459, %v460
        %v462 = vrot.slane %v461, 1
        %v463 = vadd.f32 %v461, %v462
        %v464 = vrot.slane %v426, 4
        %v465 = vadd.f32 %v426, %v464
        %v466 = vrot.slane %v465, 2
        %v467 = vadd.f32 %v465, %v466
        %v468 = vrot.slane %v467, 1
        %v469 = vadd.f32 %v467, %v468
        %v470 = vrot.slane %v427, 4
        %v471 = vadd.f32 %v427, %v470
        %v472 = vrot.slane %v471, 2
        %v473 = vadd.f32 %v471, %v472
        %v474 = vrot.slane %v473, 1
        %v475 = vadd.f32 %v473, %v474
        %vm484 = vcmask 1041409
        %v485 = vsel %vm484, %v439, %v433
        %vm486 = vcmask 1042434
        %v487 = vsel %vm486, %v445, %v485
        %vm488 = vcmask 1043459
        %v489 = vsel %vm488, %v451, %v487
        %vm490 = vcmask 1044484
        %v491 = vsel %vm490, %v457, %v489
        %vm492 = vcmask 1045509
        %v493 = vsel %vm492, %v463, %v491
        %vm494 = vcmask 1046534
        %v495 = vsel %vm494, %v469, %v493
        %vm496 = vcmask 1047559
        %v497 = vsel %vm496, %v475, %v495
        %v499 = vadd.f32 %v419, %v497
        %500 = vst [vmem:[#allocation2] sm:$0xff] %v499
        %p501 = scmp.eq.s32.totalorder %s32, 3
        // Predicated region
        $region77: #{tpu_custom_call.1} parent=55 // pred_check
          %p502 = pneg %p501
        $region78: #{tpu_custom_call.1} parent=55 // pred_check_branch
          %504 = sbr.rel (%p502) target = $region80
        $region79: #{tpu_custom_call.1} parent=55 // pred_region
          %v505 = vld [vmem:[#allocation2] sm:$0xff]
          %v506 = vmul.f32 %v505, 0.03125
          %v507 = vld [vmem:[#allocation6] sm:$0xff]
          %v508 = vld [vmem:[#allocation6 + $0x8] sm:$0xff]
          %v509 = vld [vmem:[#allocation6 + $0x10] sm:$0xff]
          %v510 = vld [vmem:[#allocation6 + $0x18] sm:$0xff]
          %v511 = vld [vmem:[#allocation6 + $0x20] sm:$0xff]
          %v512 = vld [vmem:[#allocation6 + $0x28] sm:$0xff]
          %v513 = vld [vmem:[#allocation6 + $0x30] sm:$0xff]
          %v514 = vld [vmem:[#allocation6 + $0x38] sm:$0xff]
          %v515 = vld [vmem:[#allocation6 + $0x40] sm:$0xff]
          %v516 = vld [vmem:[#allocation6 + $0x48] sm:$0xff]
          %v517 = vld [vmem:[#allocation6 + $0x50] sm:$0xff]
          %v518 = vld [vmem:[#allocation6 + $0x58] sm:$0xff]
          %v519 = vld [vmem:[#allocation6 + $0x60] sm:$0xff]
          %v520 = vld [vmem:[#allocation6 + $0x68] sm:$0xff]
          %v521 = vld [vmem:[#allocation6 + $0x70] sm:$0xff]
          %v522 = vld [vmem:[#allocation6 + $0x78] sm:$0xff]
          %v523 = vld [vmem:[%s2] sm:$0x1]
          %v525 = vlaneseq
          %v526 = vshrl.u32 %v525, 7
          %v527 = vsub.s32 0, %v526
          %v528 = vrot.slane %v523, %v527
          %530 = vmatprep.subr.mxu0 0.0
          %531 = vmatpush1.msra.mxu0 %v522
          %532 = vmatprep.subr.mxu0 0.0
          %533 = vmatpush1.msra.mxu0 %v521
          %534 = vmatprep.subr.mxu0 0.0
          %535 = vmatpush1.msra.mxu0 %v520
          %536 = vmatprep.subr.mxu0 0.0
          %537 = vmatpush1.msra.mxu0 %v519
          %538 = vmatprep.subr.mxu0 0.0
          %539 = vmatpush1.msra.mxu0 %v518
          %540 = vmatprep.subr.mxu0 0.0
          %541 = vmatpush1.msra.mxu0 %v517
          %542 = vmatprep.subr.mxu0 0.0
          %543 = vmatpush1.msra.mxu0 %v516
          %544 = vmatprep.subr.mxu0 0.0
          %545 = vmatpush1.msra.mxu0 %v515
          %546 = vmatprep.subr.mxu0 0.0
          %547 = vmatpush1.msra.mxu0 %v514
          %548 = vmatprep.subr.mxu0 0.0
          %549 = vmatpush1.msra.mxu0 %v513
          %550 = vmatprep.subr.mxu0 0.0
          %551 = vmatpush1.msra.mxu0 %v512
          %552 = vmatprep.subr.mxu0 0.0
          %553 = vmatpush1.msra.mxu0 %v511
          %554 = vmatprep.subr.mxu0 0.0
          %555 = vmatpush1.msra.mxu0 %v510
          %556 = vmatprep.subr.mxu0 0.0
          %557 = vmatpush1.msra.mxu0 %v509
          %558 = vmatprep.subr.mxu0 0.0
          %559 = vmatpush1.msra.mxu0 %v508
          %560 = vmatprep.subr.mxu0 0.0
          %561 = vmatpush1.msra.mxu0 %v507
          %562 = vmatprep.subr.mxu0 0.0
          %563 = vmatpush2.msra.mxu0 0.0
          %564 = vmatprep.subr.mxu0 0.0
          %565 = vmatpush2.msra.mxu0 0.0
          %566 = vmatprep.subr.mxu0 0.0
          %567 = vmatpush2.msra.mxu0 0.0
          %568 = vmatprep.subr.mxu0 0.0
          %569 = vmatpush2.msra.mxu0 0.0
          %570 = vmatprep.subr.mxu0 0.0
          %571 = vmatpush2.msra.mxu0 0.0
          %572 = vmatprep.subr.mxu0 0.0
          %573 = vmatpush2.msra.mxu0 0.0
          %574 = vmatprep.subr.mxu0 0.0
          %575 = vmatpush2.msra.mxu0 0.0
          %576 = vmatprep.subr.mxu0 0.0
          %577 = vmatpush2.msra.mxu0 0.0
          %578 = vmatprep.subr.mxu0 0.0
          %579 = vmatpush2.msra.mxu0 0.0
          %580 = vmatprep.subr.mxu0 0.0
          %581 = vmatpush2.msra.mxu0 0.0
          %582 = vmatprep.subr.mxu0 0.0
          %583 = vmatpush2.msra.mxu0 0.0
          %584 = vmatprep.subr.mxu0 0.0
          %585 = vmatpush2.msra.mxu0 0.0
          %586 = vmatprep.subr.mxu0 0.0
          %587 = vmatpush2.msra.mxu0 0.0
          %588 = vmatprep.subr.mxu0 0.0
          %589 = vmatpush2.msra.mxu0 0.0
          %590 = vmatprep.subr.mxu0 0.0
          %591 = vmatpush2.msra.mxu0 0.0
          %592 = vmatprep.subr.mxu0 0.0
          %593 = vmatpush2.msra.mxu0 0.0
          %594 = vmatprep.mubr.f32.mxu0 0.0
          %595 = vmatmul.mubr.f32.gmra.mxu0 %v506
          %v596 = vpop.f32.mrf.mxu0
          %v597 = vadd.f32 %v528, %v596
          %v598 = vpop.f32.mrf.mxu0
          %599 = vdwg.mxu0
          %v600 = vmax.f32 %v597, 0.0
          %v601 = vld [vmem:[#allocation8] sm:$0xff]
          %v602 = vld [vmem:[#allocation8 + $0x8] sm:$0xff]
          %v603 = vld [vmem:[#allocation8 + $0x10] sm:$0xff]
          %v604 = vld [vmem:[#allocation8 + $0x18] sm:$0xff]
          %v605 = vld [vmem:[#allocation8 + $0x20] sm:$0xff]
          %v606 = vld [vmem:[#allocation8 + $0x28] sm:$0xff]
          %v607 = vld [vmem:[#allocation8 + $0x30] sm:$0xff]
          %v608 = vld [vmem:[#allocation8 + $0x38] sm:$0xff]
          %v609 = vld [vmem:[#allocation8 + $0x40] sm:$0xff]
          %v610 = vld [vmem:[#allocation8 + $0x48] sm:$0xff]
          %v611 = vld [vmem:[#allocation8 + $0x50] sm:$0xff]
          %v612 = vld [vmem:[#allocation8 + $0x58] sm:$0xff]
          %v613 = vld [vmem:[#allocation8 + $0x60] sm:$0xff]
          %v614 = vld [vmem:[#allocation8 + $0x68] sm:$0xff]
          %v615 = vld [vmem:[#allocation8 + $0x70] sm:$0xff]
          %v616 = vld [vmem:[#allocation8 + $0x78] sm:$0xff]
          %v617 = vld [vmem:[%s4] sm:$0x1]
          %v619 = vlaneseq
          %v620 = vshrl.u32 %v619, 7
          %v621 = vsub.s32 0, %v620
          %v622 = vrot.slane %v617, %v621
          %624 = vmatprep.subr.mxu0 0.0
          %625 = vmatpush1.msra.mxu0 %v616
          %626 = vmatprep.subr.mxu0 0.0
          %627 = vmatpush1.msra.mxu0 %v615
          %628 = vmatprep.subr.mxu0 0.0
          %629 = vmatpush1.msra.mxu0 %v614
          %630 = vmatprep.subr.mxu0 0.0
          %631 = vmatpush1.msra.mxu0 %v613
          %632 = vmatprep.subr.mxu0 0.0
          %633 = vmatpush1.msra.mxu0 %v612
          %634 = vmatprep.subr.mxu0 0.0
          %635 = vmatpush1.msra.mxu0 %v611
          %636 = vmatprep.subr.mxu0 0.0
          %637 = vmatpush1.msra.mxu0 %v610
          %638 = vmatprep.subr.mxu0 0.0
          %639 = vmatpush1.msra.mxu0 %v609
          %640 = vmatprep.subr.mxu0 0.0
          %641 = vmatpush1.msra.mxu0 %v608
          %642 = vmatprep.subr.mxu0 0.0
          %643 = vmatpush1.msra.mxu0 %v607
          %644 = vmatprep.subr.mxu0 0.0
          %645 = vmatpush1.msra.mxu0 %v606
          %646 = vmatprep.subr.mxu0 0.0
          %647 = vmatpush1.msra.mxu0 %v605
          %648 = vmatprep.subr.mxu0 0.0
          %649 = vmatpush1.msra.mxu0 %v604
          %650 = vmatprep.subr.mxu0 0.0
          %651 = vmatpush1.msra.mxu0 %v603
          %652 = vmatprep.subr.mxu0 0.0
          %653 = vmatpush1.msra.mxu0 %v602
          %654 = vmatprep.subr.mxu0 0.0
          %655 = vmatpush1.msra.mxu0 %v601
          %656 = vmatprep.subr.mxu0 0.0
          %657 = vmatpush2.msra.mxu0 0.0
          %658 = vmatprep.subr.mxu0 0.0
          %659 = vmatpush2.msra.mxu0 0.0
          %660 = vmatprep.subr.mxu0 0.0
          %661 = vmatpush2.msra.mxu0 0.0
          %662 = vmatprep.subr.mxu0 0.0
          %663 = vmatpush2.msra.mxu0 0.0
          %664 = vmatprep.subr.mxu0 0.0
          %665 = vmatpush2.msra.mxu0 0.0
          %666 = vmatprep.subr.mxu0 0.0
          %667 = vmatpush2.msra.mxu0 0.0
          %668 = vmatprep.subr.mxu0 0.0
          %669 = vmatpush2.msra.mxu0 0.0
          %670 = vmatprep.subr.mxu0 0.0
          %671 = vmatpush2.msra.mxu0 0.0
          %672 = vmatprep.subr.mxu0 0.0
          %673 = vmatpush2.msra.mxu0 0.0
          %674 = vmatprep.subr.mxu0 0.0
          %675 = vmatpush2.msra.mxu0 0.0
          %676 = vmatprep.subr.mxu0 0.0
          %677 = vmatpush2.msra.mxu0 0.0
          %678 = vmatprep.subr.mxu0 0.0
          %679 = vmatpush2.msra.mxu0 0.0
          %680 = vmatprep.subr.mxu0 0.0
          %681 = vmatpush2.msra.mxu0 0.0
          %682 = vmatprep.subr.mxu0 0.0
          %683 = vmatpush2.msra.mxu0 0.0
          %684 = vmatprep.subr.mxu0 0.0
          %685 = vmatpush2.msra.mxu0 0.0
          %686 = vmatprep.subr.mxu0 0.0
          %687 = vmatpush2.msra.mxu0 0.0
          %688 = vmatprep.mubr.f32.mxu0 0.0
          %689 = vmatmul.mubr.f32.gmra.mxu0 %v600
          %v690 = vpop.f32.mrf.mxu0
          %v691 = vadd.f32 %v622, %v690
          %v692 = vpop.f32.mrf.mxu0
          %693 = vdwg.mxu0
          %v694 = vmax.f32 %v691, 0.0
          %v695 = vld [vmem:[#allocation9] sm:$0xff]
          %v696 = vld [vmem:[#allocation9 + $0x8] sm:$0xff]
          %v697 = vld [vmem:[#allocation9 + $0x10] sm:$0xff]
          %v698 = vld [vmem:[#allocation9 + $0x18] sm:$0xff]
          %v699 = vld [vmem:[#allocation9 + $0x20] sm:$0xff]
          %v700 = vld [vmem:[#allocation9 + $0x28] sm:$0xff]
          %v701 = vld [vmem:[#allocation9 + $0x30] sm:$0xff]
          %v702 = vld [vmem:[#allocation9 + $0x38] sm:$0xff]
          %v703 = vld [vmem:[#allocation9 + $0x40] sm:$0xff]
          %v704 = vld [vmem:[#allocation9 + $0x48] sm:$0xff]
          %v705 = vld [vmem:[#allocation9 + $0x50] sm:$0xff]
          %v706 = vld [vmem:[#allocation9 + $0x58] sm:$0xff]
          %v707 = vld [vmem:[#allocation9 + $0x60] sm:$0xff]
          %v708 = vld [vmem:[#allocation9 + $0x68] sm:$0xff]
          %v709 = vld [vmem:[#allocation9 + $0x70] sm:$0xff]
          %v710 = vld [vmem:[#allocation9 + $0x78] sm:$0xff]
          %v711 = vld [vmem:[%s6] sm:$0x1]
          %v713 = vlaneseq
          %v714 = vshrl.u32 %v713, 7
          %v715 = vsub.s32 0, %v714
          %v716 = vrot.slane %v711, %v715
          %718 = vmatprep.subr.mxu0 0.0
          %719 = vmatpush1.msra.mxu0 %v710
          %720 = vmatprep.subr.mxu0 0.0
          %721 = vmatpush1.msra.mxu0 %v709
          %722 = vmatprep.subr.mxu0 0.0
          %723 = vmatpush1.msra.mxu0 %v708
          %724 = vmatprep.subr.mxu0 0.0
          %725 = vmatpush1.msra.mxu0 %v707
          %726 = vmatprep.subr.mxu0 0.0
          %727 = vmatpush1.msra.mxu0 %v706
          %728 = vmatprep.subr.mxu0 0.0
          %729 = vmatpush1.msra.mxu0 %v705
          %730 = vmatprep.subr.mxu0 0.0
          %731 = vmatpush1.msra.mxu0 %v704
          %732 = vmatprep.subr.mxu0 0.0
          %733 = vmatpush1.msra.mxu0 %v703
          %734 = vmatprep.subr.mxu0 0.0
          %735 = vmatpush1.msra.mxu0 %v702
          %736 = vmatprep.subr.mxu0 0.0
          %737 = vmatpush1.msra.mxu0 %v701
          %738 = vmatprep.subr.mxu0 0.0
          %739 = vmatpush1.msra.mxu0 %v700
          %740 = vmatprep.subr.mxu0 0.0
          %741 = vmatpush1.msra.mxu0 %v699
          %742 = vmatprep.subr.mxu0 0.0
          %743 = vmatpush1.msra.mxu0 %v698
          %744 = vmatprep.subr.mxu0 0.0
          %745 = vmatpush1.msra.mxu0 %v697
          %746 = vmatprep.subr.mxu0 0.0
          %747 = vmatpush1.msra.mxu0 %v696
          %748 = vmatprep.subr.mxu0 0.0
          %749 = vmatpush1.msra.mxu0 %v695
          %750 = vmatprep.subr.mxu0 0.0
          %751 = vmatpush2.msra.mxu0 0.0
          %752 = vmatprep.subr.mxu0 0.0
          %753 = vmatpush2.msra.mxu0 0.0
          %754 = vmatprep.subr.mxu0 0.0
          %755 = vmatpush2.msra.mxu0 0.0
          %756 = vmatprep.subr.mxu0 0.0
          %757 = vmatpush2.msra.mxu0 0.0
          %758 = vmatprep.subr.mxu0 0.0
          %759 = vmatpush2.msra.mxu0 0.0
          %760 = vmatprep.subr.mxu0 0.0
          %761 = vmatpush2.msra.mxu0 0.0
          %762 = vmatprep.subr.mxu0 0.0
          %763 = vmatpush2.msra.mxu0 0.0
          %764 = vmatprep.subr.mxu0 0.0
          %765 = vmatpush2.msra.mxu0 0.0
          %766 = vmatprep.subr.mxu0 0.0
          %767 = vmatpush2.msra.mxu0 0.0
          %768 = vmatprep.subr.mxu0 0.0
          %769 = vmatpush2.msra.mxu0 0.0
          %770 = vmatprep.subr.mxu0 0.0
          %771 = vmatpush2.msra.mxu0 0.0
          %772 = vmatprep.subr.mxu0 0.0
          %773 = vmatpush2.msra.mxu0 0.0
          %774 = vmatprep.subr.mxu0 0.0
          %775 = vmatpush2.msra.mxu0 0.0
          %776 = vmatprep.subr.mxu0 0.0
          %777 = vmatpush2.msra.mxu0 0.0
          %778 = vmatprep.subr.mxu0 0.0
          %779 = vmatpush2.msra.mxu0 0.0
          %780 = vmatprep.subr.mxu0 0.0
          %781 = vmatpush2.msra.mxu0 0.0
          %782 = vmatprep.mubr.f32.mxu0 0.0
          %783 = vmatmul.mubr.f32.gmra.mxu0 %v694
          %v784 = vpop.f32.mrf.mxu0
          %v785 = vadd.f32 %v716, %v784
          %v786 = vpop.f32.mrf.mxu0
          %787 = vdwg.mxu0
          %v788 = vmax.f32 %v785, 0.0
          %v789 = vld [vmem:[%s7] sm:$0x1]
          %v791 = vlaneseq
          %v792 = vshrl.u32 %v791, 7
          %v793 = vsub.s32 0, %v792
          %v794 = vrot.slane %v789, %v793
          %v796 = vmul.f32 %v788, %v794
          %797 = vadd.xlane.f32.xlu0 %v796
          %v798 = vpop.xlane.xlu0 %797
          %v799 = vld [vmem:[#allocation3] sm:$0x1]
          %v801 = vlaneseq
          %v802 = vshrl.u32 %v801, 7
          %v803 = vsub.s32 0, %v802
          %v804 = vrot.slane %v799, %v803
          %v806 = vadd.f32 %v798, %v804
          %vm807 = vcmask 7168
          %808 = vst.msk [vmem:[%s413] sm:$0xff] %vm807, %v806
        $region80: #{tpu_custom_call.1} parent=55 // pred_fallthru
          _
        %p809 = scmp.lt.s32.totalorder %s31, 1
        %s810 = scalar_select %p809, %s31, 1
        %s811 = smul.addr %s810, 8
        %s812 = scalar_lea.vmem %s9, %s811
        // Predicated region
        $region81: #{tpu_custom_call.1} parent=55 // pred_check
          %p813 = pneg %p253
        $region82: #{tpu_custom_call.1} parent=55 // pred_check_branch
          %815 = sbr.rel (%p813) target = $region84
        $region83: #{tpu_custom_call.1} parent=55 // pred_region
          _
        $region84: #{tpu_custom_call.1} parent=55 // pred_fallthru
          _
      $region56: #{tpu_custom_call.1} parent=5 // pred_fallthru
        _
      %p816 = scmp.le.s32.totalorder 2, %s22
      // Predicated region
      $region85: #{tpu_custom_call.1} parent=5 // pred_check
        %p817 = pneg %p816
      $region86: #{tpu_custom_call.1} parent=5 // pred_check_branch
        %819 = sbr.rel (%p817) target = $region88
      $region87: #{tpu_custom_call.1} parent=5 // pred_region
        %s820 = ssub.s32 %s22, 2
        // Predicated region
        $region89: #{tpu_custom_call.1} parent=87 // pred_check
          %p821 = pneg %p259
        $region90: #{tpu_custom_call.1} parent=87 // pred_check_branch
          %823 = sbr.rel (%p821) target = $region92
        $region91: #{tpu_custom_call.1} parent=87 // pred_region
          %p824 = scmp.lt.s32.totalorder %s33, 1
          %s825 = scalar_select %p824, %s33, 1
          %s826 = smul.addr %s825, 8
          %s827 = scalar_lea.vmem %s9, %s826
        $region92: #{tpu_custom_call.1} parent=87 // pred_fallthru
          _
      $region88: #{tpu_custom_call.1} parent=5 // pred_fallthru
        _
    $region6: #{tpu_custom_call.1} parent=1 // loop_footer
      %s26 = sadd.s32 1, %s22
    $region7: #{tpu_custom_call.1} parent=1 // loop_footer_branch
      %21 = sbr.rel target = $region3
    $region8: #{tpu_custom_call.1} parent=1 // loop_exit
      _
    %828 = vsyncpa [#allocation5], 1
    %s829 = scalar_lea.sflag [#allocation5], 1
    %830 = vsyncpa %s829, 1
    %831 = vsyncpa [#allocation7], 1
    %832 = vsyncpa [#allocation10], 1

</llo_original>
